<compile_context>
chip_gen: v6e
topology: v6e:2x2x1
jax: 0.10.0
libtpu: 0.0.40
codegen_flags: <defaults>
</compile_context>

<pallas_src>
import functools

import jax
import jax.numpy as jnp
from jax import lax
from jax.experimental import pallas as pl
from jax.experimental.pallas import tpu as pltpu


SLAB_ROWS = 48
SLAB_COLS = 128


def _round_up(n, m):
    return ((n + m - 1) // m) * m


# ---------------------------------------------------------------------------
# Parameter packing: one (48, 128) f32 slab (PyTorch convention W: (out, in)).
#   rows  0:16 : w1 (16, 4)   in cols 0:4,   b1 (16,) in col 4
#   rows 16:32 : w2 (16, 16)  in cols 0:16,  b2 (16,) in col 16
#   rows 32:48 : w3.T (16, 2) in cols 0:2,   b3 ( 2,) in rows 32:34, col 2
# ---------------------------------------------------------------------------
def pack_params(params):
    w1, b1, w2, b2, w3, b3 = params
    slab = jnp.zeros((SLAB_ROWS, SLAB_COLS), jnp.float32)
    slab = slab.at[0:16, 0:4].set(w1.astype(jnp.float32))
    slab = slab.at[0:16, 4].set(b1.astype(jnp.float32))
    slab = slab.at[16:32, 0:16].set(w2.astype(jnp.float32))
    slab = slab.at[16:32, 16].set(b2.astype(jnp.float32))
    slab = slab.at[32:48, 0:2].set(w3.T.astype(jnp.float32))
    slab = slab.at[32:34, 2].set(b3.astype(jnp.float32))
    return slab


# ---------------------------------------------------------------------------
# Kernel: x_ref (4, TB) [f32 or bf16], w_ref (48, 128) f32, o_ref (2, TB) f32.
# Batch on lanes.  The TB tile is processed in lane sub-chunks to keep the live
# vreg set small at large TB.
# ---------------------------------------------------------------------------
def qnet_kernel(x_ref, w_ref, o_ref):
    tb = x_ref.shape[1]
    cd = x_ref.dtype

    # Sub-chunk width: bf16 vregs hold 2x the lanes, so a wider chunk is safe.
    target = 512 if cd == jnp.bfloat16 else 256
    if tb % target == 0:
        chunk = target
    elif tb % 256 == 0:
        chunk = 256
    else:
        chunk = 128
    n_chunks = tb // chunk

    # The weight slab is tiny: load + cast ONCE per grid step, outside the loop.
    w1 = w_ref[0:16, 0:4].astype(cd)       # (16, 4)
    b1 = w_ref[0:16, 4:5].astype(cd)       # (16, 1)
    w2 = w_ref[16:32, 0:16].astype(cd)     # (16, 16)
    b2 = w_ref[16:32, 16:17].astype(cd)    # (16, 1)
    w3c0 = w_ref[32:48, 0:1].astype(cd)    # (16, 1) == w3[0, :]^T
    w3c1 = w_ref[32:48, 1:2].astype(cd)    # (16, 1) == w3[1, :]^T
    b3 = w_ref[32:34, 2:3]                 # (2, 1)  f32

    def dense(wm, bm, act, n_in):
        # (n_out, n_in) @ (n_in, chunk): unrolled VPU broadcast-FMA over K <= 16
        # (avoids degenerate small-K MXU pushes).
        acc = bm + wm[:, 0:1] * act[0:1, :]
        for k in range(1, n_in):
            acc = acc + wm[:, k:k + 1] * act[k:k + 1, :]
        return acc

    def process(off):
        xin = x_ref[:, pl.ds(off, chunk)]                       # (4, chunk)
        h1 = jnp.maximum(dense(w1, b1, xin, 4), 0)               # (16, chunk)
        h2 = jnp.maximum(dense(w2, b2, h1, 16), 0)               # (16, chunk)
        # Layer 3: elementwise mul + cross-sublane (XLU) reduction in f32; avoids
        # a sublane-padded (2, chunk) outer-product accumulator.
        o0 = jnp.sum((w3c0 * h2).astype(jnp.float32), axis=0, keepdims=True)
        o1 = jnp.sum((w3c1 * h2).astype(jnp.float32), axis=0, keepdims=True)
        out = jnp.concatenate([o0, o1], axis=0) + b3              # (2, chunk) f32
        o_ref[:, pl.ds(off, chunk)] = out.astype(o_ref.dtype)

    if n_chunks == 1:
        process(0)
    else:
        def body(c, carry):
            process(pl.multiple_of(c * chunk, chunk))
            return carry
        lax.fori_loop(0, n_chunks, body, 0, unroll=2)


# ---------------------------------------------------------------------------
# pallas_call wrapper (feature-major in/out; batch tiled on a 1-D grid).
# ---------------------------------------------------------------------------
def _qnet_pallas(xt, w_slab, tb):
    b_pad = xt.shape[1]
    return pl.pallas_call(
        qnet_kernel,
        out_shape=jax.ShapeDtypeStruct((2, b_pad), jnp.float32),
        grid_spec=pltpu.PrefetchScalarGridSpec(
            num_scalar_prefetch=0,
            grid=(b_pad // tb,),
            in_specs=[
                pl.BlockSpec((4, tb), lambda i: (0, i)),                  # x: streamed over batch
                pl.BlockSpec((SLAB_ROWS, SLAB_COLS), lambda i: (0, 0)),   # weights: resident
            ],
            out_specs=pl.BlockSpec((2, tb), lambda i: (0, i)),
        ),
        compiler_params=pltpu.CompilerParams(
            dimension_semantics=("parallel",),   # batch tiles shard across TCs (v7x)
        ),
    )(xt, w_slab)


def _choose_tile(batch, tb_req):
    """Round the requested tile to lanes and clamp so that (a) tiny batches do
    not over-pad and (b) there are >= 2 tiles whenever >= 2 lane-tiles of work
    exist (keeps both v7x TensorCores busy; neutral on v5e/v6e)."""
    lane = 128
    tb = _round_up(max(int(tb_req), lane), lane)
    b128 = _round_up(batch, lane)
    cap = _round_up(b128 // 2, lane) if b128 >= 2 * lane else b128
    tb = min(tb, cap)
    b_pad = _round_up(batch, tb)
    return tb, b_pad


def _default_compute_dtype():
    # bf16 VPU exists on v6e / v7x; v5e and older keep f32 activations.
    try:
        dev = jax.devices()[0]
    except Exception:
        return jnp.float32
    if dev.platform != "tpu":
        return jnp.float32
    kind = dev.device_kind.lower()
    if ("v6" in kind) or ("v7" in kind) or ("7x" in kind):
        return jnp.bfloat16
    return jnp.float32


# ---------------------------------------------------------------------------
# Public forwards.  Everything (cast, transpose, pad, kernel, slice, transpose
# back) runs under one jit so XLA fuses the layout plumbing with the kernel.
# ---------------------------------------------------------------------------
@functools.partial(jax.jit, static_argnames=("tb", "compute_dtype"))
def _qnet_forward_jit(x, w_slab, tb, compute_dtype):
    batch = x.shape[0]
    tb_eff, b_pad = _choose_tile(batch, tb)
    xt = jnp.pad(x.astype(compute_dtype).T, ((0, 0), (0, b_pad - batch)))
    out_t = _qnet_pallas(xt, w_slab, tb_eff)
    return out_t[:, :batch].T                       # (batch, 2) f32


def qnet_forward(x, w_slab, tb=8192, compute_dtype=None):
    """Batch-major QNet forward: x (B, 4) -> (B, 2), matching the PyTorch module."""
    if compute_dtype is None:
        compute_dtype = _default_compute_dtype()
    return _qnet_forward_jit(x, w_slab, tb=tb, compute_dtype=compute_dtype)


@functools.partial(jax.jit, static_argnames=("tb", "compute_dtype"))
def _qnet_forward_fm_jit(xt, w_slab, tb, compute_dtype):
    n = xt.shape[1]
    tb_eff, n_pad = _choose_tile(n, tb)
    xt = jnp.pad(xt.astype(compute_dtype), ((0, 0), (0, n_pad - n)))
    return _qnet_pallas(xt, w_slab, tb_eff)[:, :n]


def qnet_forward_fm(xt, w_slab, tb=8192, compute_dtype=None):
    """Feature-major fast path (no transposes): xt (4, N) -> (2, N) f32."""
    if compute_dtype is None:
        compute_dtype = _default_compute_dtype()
    return _qnet_forward_fm_jit(xt, w_slab, tb=tb, compute_dtype=compute_dtype)


# ---------------------------------------------------------------------------
# Init (nn.Linear defaults: U(-1/sqrt(fan_in), 1/sqrt(fan_in))), W (out, in).
# ---------------------------------------------------------------------------
def init_qnet_params(key):
    dims = [(4, 16), (16, 16), (16, 2)]
    params = []
    for fan_in, fan_out in dims:
        kw, kb, key = jax.random.split(key, 3)
        bound = 1.0 / (fan_in ** 0.5)
        params.append(jax.random.uniform(kw, (fan_out, fan_in), jnp.float32, -bound, bound))
        params.append(jax.random.uniform(kb, (fan_out,), jnp.float32, -bound, bound))
    return tuple(params)


def qnet_ref(x, params):
    w1, b1, w2, b2, w3, b3 = params
    h = jnp.maximum(x @ w1.T + b1, 0.0)
    h = jnp.maximum(h @ w2.T + b2, 0.0)
    return h @ w3.T + b3


if __name__ == "__main__":
    key = jax.random.PRNGKey(0)
    kp, kx1, kx2, kx3 = jax.random.split(key, 4)
    params = init_qnet_params(kp)
    w_slab = pack_params(params)

    cd = _default_compute_dtype()
    # bf16 activations (v6e/v7x) need a relaxed tolerance; the f32 path is tight.
    atol, rtol = (2e-1, 5e-2) if cd == jnp.bfloat16 else (1e-5, 1e-5)

    def check(x, tb):
        out = jax.block_until_ready(qnet_forward(x, w_slab, tb=tb))
        ref = qnet_ref(x, params)
        assert out.shape == ref.shape, (out.shape, ref.shape)
        assert jnp.allclose(out, ref, atol=atol, rtol=rtol), \
            float(jnp.max(jnp.abs(out - ref)))

    # Tiny batch (typical CartPole act()): single tile, single chunk, grid=1.
    check(jax.random.normal(kx1, (8, 4), dtype=jnp.float32), tb=8192)
    # Non-multiple-of-128 batch: padding path, grid=2 (both v7x TCs busy).
    check(jax.random.normal(kx2, (300, 4), dtype=jnp.float32), tb=512)
    # Larger batch: default big tile + in-kernel sub-chunk fori_loop, grid=2.
    check(jax.random.normal(kx3, (3000, 4), dtype=jnp.float32), tb=8192)

    print("KERNEL_OK")
</pallas_src>

<mosaic_0001>
module attributes {stable_mosaic.version = 11 : i64} {
  func.func @qnet_kernel(%arg0: i32, %arg1: memref<4x128xf32, #tpu.memory_space<vmem>>, %arg2: memref<48x128xf32, #tpu.memory_space<vmem>>, %arg3: memref<2x128xf32, #tpu.memory_space<vmem>>) attributes {dimension_semantics = [#tpu.dimension_semantics<parallel>], iteration_bounds = array<i64: 1>, scalar_prefetch = 0 : i64, scratch_operands = 0 : i64, tpu.core_type = #tpu.core_type<tc>, window_params = [{transform_indices = @transform_0, window_bounds = array<i64: 4, 128>}, {pipeline_mode = #tpu.pipeline_mode<synchronous>, transform_indices = @transform_1, window_bounds = array<i64: 48, 128>}, {transform_indices = @transform_2, window_bounds = array<i64: 2, 128>}]} {
    %c0 = arith.constant 0 : index
    %c0_0 = arith.constant 0 : index
    %0 = vector.load %arg2[%c0, %c0_0] : memref<48x128xf32, #tpu.memory_space<vmem>>, vector<16x4xf32>
    %c0_1 = arith.constant 0 : index
    %c4 = arith.constant 4 : index
    %1 = vector.load %arg2[%c0_1, %c4] : memref<48x128xf32, #tpu.memory_space<vmem>>, vector<16x1xf32>
    %c16 = arith.constant 16 : index
    %c0_2 = arith.constant 0 : index
    %2 = vector.load %arg2[%c16, %c0_2] : memref<48x128xf32, #tpu.memory_space<vmem>>, vector<16x16xf32>
    %c16_3 = arith.constant 16 : index
    %c16_4 = arith.constant 16 : index
    %3 = vector.load %arg2[%c16_3, %c16_4] : memref<48x128xf32, #tpu.memory_space<vmem>>, vector<16x1xf32>
    %c32 = arith.constant 32 : index
    %c0_5 = arith.constant 0 : index
    %4 = vector.load %arg2[%c32, %c0_5] : memref<48x128xf32, #tpu.memory_space<vmem>>, vector<16x1xf32>
    %c32_6 = arith.constant 32 : index
    %c1 = arith.constant 1 : index
    %5 = vector.load %arg2[%c32_6, %c1] : memref<48x128xf32, #tpu.memory_space<vmem>>, vector<16x1xf32>
    %c32_7 = arith.constant 32 : index
    %c2 = arith.constant 2 : index
    %6 = vector.load %arg2[%c32_7, %c2] : memref<48x128xf32, #tpu.memory_space<vmem>>, vector<2x1xf32>
    %c0_8 = arith.constant 0 : index
    %c0_9 = arith.constant 0 : index
    %7 = vector.load %arg1[%c0_8, %c0_9] : memref<4x128xf32, #tpu.memory_space<vmem>>, vector<4x128xf32>
    %8 = vector.extract_strided_slice %0 {offsets = [0, 0], sizes = [16, 1], strides = [1, 1]} : vector<16x4xf32> to vector<16x1xf32>
    %9 = vector.extract_strided_slice %7 {offsets = [0, 0], sizes = [1, 128], strides = [1, 1]} : vector<4x128xf32> to vector<1x128xf32>
    %10 = vector.broadcast %8 : vector<16x1xf32> to vector<16x128xf32>
    %11 = vector.broadcast %9 : vector<1x128xf32> to vector<16x128xf32>
    %12 = arith.mulf %10, %11 : vector<16x128xf32>
    %13 = vector.broadcast %1 : vector<16x1xf32> to vector<16x128xf32>
    %14 = arith.addf %13, %12 : vector<16x128xf32>
    %15 = vector.extract_strided_slice %0 {offsets = [0, 1], sizes = [16, 1], strides = [1, 1]} : vector<16x4xf32> to vector<16x1xf32>
    %16 = vector.extract_strided_slice %7 {offsets = [1, 0], sizes = [1, 128], strides = [1, 1]} : vector<4x128xf32> to vector<1x128xf32>
    %17 = vector.broadcast %15 : vector<16x1xf32> to vector<16x128xf32>
    %18 = vector.broadcast %16 : vector<1x128xf32> to vector<16x128xf32>
    %19 = arith.mulf %17, %18 : vector<16x128xf32>
    %20 = arith.addf %14, %19 : vector<16x128xf32>
    %21 = vector.extract_strided_slice %0 {offsets = [0, 2], sizes = [16, 1], strides = [1, 1]} : vector<16x4xf32> to vector<16x1xf32>
    %22 = vector.extract_strided_slice %7 {offsets = [2, 0], sizes = [1, 128], strides = [1, 1]} : vector<4x128xf32> to vector<1x128xf32>
    %23 = vector.broadcast %21 : vector<16x1xf32> to vector<16x128xf32>
    %24 = vector.broadcast %22 : vector<1x128xf32> to vector<16x128xf32>
    %25 = arith.mulf %23, %24 : vector<16x128xf32>
    %26 = arith.addf %20, %25 : vector<16x128xf32>
    %27 = vector.extract_strided_slice %0 {offsets = [0, 3], sizes = [16, 1], strides = [1, 1]} : vector<16x4xf32> to vector<16x1xf32>
    %28 = vector.extract_strided_slice %7 {offsets = [3, 0], sizes = [1, 128], strides = [1, 1]} : vector<4x128xf32> to vector<1x128xf32>
    %29 = vector.broadcast %27 : vector<16x1xf32> to vector<16x128xf32>
    %30 = vector.broadcast %28 : vector<1x128xf32> to vector<16x128xf32>
    %31 = arith.mulf %29, %30 : vector<16x128xf32>
    %32 = arith.addf %26, %31 : vector<16x128xf32>
    %cst = arith.constant 0.000000e+00 : f32
    %33 = vector.broadcast %cst : f32 to vector<16x128xf32>
    %34 = arith.maximumf %32, %33 : vector<16x128xf32>
    %35 = vector.extract_strided_slice %2 {offsets = [0, 0], sizes = [16, 1], strides = [1, 1]} : vector<16x16xf32> to vector<16x1xf32>
    %36 = vector.extract_strided_slice %34 {offsets = [0, 0], sizes = [1, 128], strides = [1, 1]} : vector<16x128xf32> to vector<1x128xf32>
    %37 = vector.broadcast %35 : vector<16x1xf32> to vector<16x128xf32>
    %38 = vector.broadcast %36 : vector<1x128xf32> to vector<16x128xf32>
    %39 = arith.mulf %37, %38 : vector<16x128xf32>
    %40 = vector.broadcast %3 : vector<16x1xf32> to vector<16x128xf32>
    %41 = arith.addf %40, %39 : vector<16x128xf32>
    %42 = vector.extract_strided_slice %2 {offsets = [0, 1], sizes = [16, 1], strides = [1, 1]} : vector<16x16xf32> to vector<16x1xf32>
    %43 = vector.extract_strided_slice %34 {offsets = [1, 0], sizes = [1, 128], strides = [1, 1]} : vector<16x128xf32> to vector<1x128xf32>
    %44 = vector.broadcast %42 : vector<16x1xf32> to vector<16x128xf32>
    %45 = vector.broadcast %43 : vector<1x128xf32> to vector<16x128xf32>
    %46 = arith.mulf %44, %45 : vector<16x128xf32>
    %47 = arith.addf %41, %46 : vector<16x128xf32>
    %48 = vector.extract_strided_slice %2 {offsets = [0, 2], sizes = [16, 1], strides = [1, 1]} : vector<16x16xf32> to vector<16x1xf32>
    %49 = vector.extract_strided_slice %34 {offsets = [2, 0], sizes = [1, 128], strides = [1, 1]} : vector<16x128xf32> to vector<1x128xf32>
    %50 = vector.broadcast %48 : vector<16x1xf32> to vector<16x128xf32>
    %51 = vector.broadcast %49 : vector<1x128xf32> to vector<16x128xf32>
    %52 = arith.mulf %50, %51 : vector<16x128xf32>
    %53 = arith.addf %47, %52 : vector<16x128xf32>
    %54 = vector.extract_strided_slice %2 {offsets = [0, 3], sizes = [16, 1], strides = [1, 1]} : vector<16x16xf32> to vector<16x1xf32>
    %55 = vector.extract_strided_slice %34 {offsets = [3, 0], sizes = [1, 128], strides = [1, 1]} : vector<16x128xf32> to vector<1x128xf32>
    %56 = vector.broadcast %54 : vector<16x1xf32> to vector<16x128xf32>
    %57 = vector.broadcast %55 : vector<1x128xf32> to vector<16x128xf32>
    %58 = arith.mulf %56, %57 : vector<16x128xf32>
    %59 = arith.addf %53, %58 : vector<16x128xf32>
    %60 = vector.extract_strided_slice %2 {offsets = [0, 4], sizes = [16, 1], strides = [1, 1]} : vector<16x16xf32> to vector<16x1xf32>
    %61 = vector.extract_strided_slice %34 {offsets = [4, 0], sizes = [1, 128], strides = [1, 1]} : vector<16x128xf32> to vector<1x128xf32>
    %62 = vector.broadcast %60 : vector<16x1xf32> to vector<16x128xf32>
    %63 = vector.broadcast %61 : vector<1x128xf32> to vector<16x128xf32>
    %64 = arith.mulf %62, %63 : vector<16x128xf32>
    %65 = arith.addf %59, %64 : vector<16x128xf32>
    %66 = vector.extract_strided_slice %2 {offsets = [0, 5], sizes = [16, 1], strides = [1, 1]} : vector<16x16xf32> to vector<16x1xf32>
    %67 = vector.extract_strided_slice %34 {offsets = [5, 0], sizes = [1, 128], strides = [1, 1]} : vector<16x128xf32> to vector<1x128xf32>
    %68 = vector.broadcast %66 : vector<16x1xf32> to vector<16x128xf32>
    %69 = vector.broadcast %67 : vector<1x128xf32> to vector<16x128xf32>
    %70 = arith.mulf %68, %69 : vector<16x128xf32>
    %71 = arith.addf %65, %70 : vector<16x128xf32>
    %72 = vector.extract_strided_slice %2 {offsets = [0, 6], sizes = [16, 1], strides = [1, 1]} : vector<16x16xf32> to vector<16x1xf32>
    %73 = vector.extract_strided_slice %34 {offsets = [6, 0], sizes = [1, 128], strides = [1, 1]} : vector<16x128xf32> to vector<1x128xf32>
    %74 = vector.broadcast %72 : vector<16x1xf32> to vector<16x128xf32>
    %75 = vector.broadcast %73 : vector<1x128xf32> to vector<16x128xf32>
    %76 = arith.mulf %74, %75 : vector<16x128xf32>
    %77 = arith.addf %71, %76 : vector<16x128xf32>
    %78 = vector.extract_strided_slice %2 {offsets = [0, 7], sizes = [16, 1], strides = [1, 1]} : vector<16x16xf32> to vector<16x1xf32>
    %79 = vector.extract_strided_slice %34 {offsets = [7, 0], sizes = [1, 128], strides = [1, 1]} : vector<16x128xf32> to vector<1x128xf32>
    %80 = vector.broadcast %78 : vector<16x1xf32> to vector<16x128xf32>
    %81 = vector.broadcast %79 : vector<1x128xf32> to vector<16x128xf32>
    %82 = arith.mulf %80, %81 : vector<16x128xf32>
    %83 = arith.addf %77, %82 : vector<16x128xf32>
    %84 = vector.extract_strided_slice %2 {offsets = [0, 8], sizes = [16, 1], strides = [1, 1]} : vector<16x16xf32> to vector<16x1xf32>
    %85 = vector.extract_strided_slice %34 {offsets = [8, 0], sizes = [1, 128], strides = [1, 1]} : vector<16x128xf32> to vector<1x128xf32>
    %86 = vector.broadcast %84 : vector<16x1xf32> to vector<16x128xf32>
    %87 = vector.broadcast %85 : vector<1x128xf32> to vector<16x128xf32>
    %88 = arith.mulf %86, %87 : vector<16x128xf32>
    %89 = arith.addf %83, %88 : vector<16x128xf32>
    %90 = vector.extract_strided_slice %2 {offsets = [0, 9], sizes = [16, 1], strides = [1, 1]} : vector<16x16xf32> to vector<16x1xf32>
    %91 = vector.extract_strided_slice %34 {offsets = [9, 0], sizes = [1, 128], strides = [1, 1]} : vector<16x128xf32> to vector<1x128xf32>
    %92 = vector.broadcast %90 : vector<16x1xf32> to vector<16x128xf32>
    %93 = vector.broadcast %91 : vector<1x128xf32> to vector<16x128xf32>
    %94 = arith.mulf %92, %93 : vector<16x128xf32>
    %95 = arith.addf %89, %94 : vector<16x128xf32>
    %96 = vector.extract_strided_slice %2 {offsets = [0, 10], sizes = [16, 1], strides = [1, 1]} : vector<16x16xf32> to vector<16x1xf32>
    %97 = vector.extract_strided_slice %34 {offsets = [10, 0], sizes = [1, 128], strides = [1, 1]} : vector<16x128xf32> to vector<1x128xf32>
    %98 = vector.broadcast %96 : vector<16x1xf32> to vector<16x128xf32>
    %99 = vector.broadcast %97 : vector<1x128xf32> to vector<16x128xf32>
    %100 = arith.mulf %98, %99 : vector<16x128xf32>
    %101 = arith.addf %95, %100 : vector<16x128xf32>
    %102 = vector.extract_strided_slice %2 {offsets = [0, 11], sizes = [16, 1], strides = [1, 1]} : vector<16x16xf32> to vector<16x1xf32>
    %103 = vector.extract_strided_slice %34 {offsets = [11, 0], sizes = [1, 128], strides = [1, 1]} : vector<16x128xf32> to vector<1x128xf32>
    %104 = vector.broadcast %102 : vector<16x1xf32> to vector<16x128xf32>
    %105 = vector.broadcast %103 : vector<1x128xf32> to vector<16x128xf32>
    %106 = arith.mulf %104, %105 : vector<16x128xf32>
    %107 = arith.addf %101, %106 : vector<16x128xf32>
    %108 = vector.extract_strided_slice %2 {offsets = [0, 12], sizes = [16, 1], strides = [1, 1]} : vector<16x16xf32> to vector<16x1xf32>
    %109 = vector.extract_strided_slice %34 {offsets = [12, 0], sizes = [1, 128], strides = [1, 1]} : vector<16x128xf32> to vector<1x128xf32>
    %110 = vector.broadcast %108 : vector<16x1xf32> to vector<16x128xf32>
    %111 = vector.broadcast %109 : vector<1x128xf32> to vector<16x128xf32>
    %112 = arith.mulf %110, %111 : vector<16x128xf32>
    %113 = arith.addf %107, %112 : vector<16x128xf32>
    %114 = vector.extract_strided_slice %2 {offsets = [0, 13], sizes = [16, 1], strides = [1, 1]} : vector<16x16xf32> to vector<16x1xf32>
    %115 = vector.extract_strided_slice %34 {offsets = [13, 0], sizes = [1, 128], strides = [1, 1]} : vector<16x128xf32> to vector<1x128xf32>
    %116 = vector.broadcast %114 : vector<16x1xf32> to vector<16x128xf32>
    %117 = vector.broadcast %115 : vector<1x128xf32> to vector<16x128xf32>
    %118 = arith.mulf %116, %117 : vector<16x128xf32>
    %119 = arith.addf %113, %118 : vector<16x128xf32>
    %120 = vector.extract_strided_slice %2 {offsets = [0, 14], sizes = [16, 1], strides = [1, 1]} : vector<16x16xf32> to vector<16x1xf32>
    %121 = vector.extract_strided_slice %34 {offsets = [14, 0], sizes = [1, 128], strides = [1, 1]} : vector<16x128xf32> to vector<1x128xf32>
    %122 = vector.broadcast %120 : vector<16x1xf32> to vector<16x128xf32>
    %123 = vector.broadcast %121 : vector<1x128xf32> to vector<16x128xf32>
    %124 = arith.mulf %122, %123 : vector<16x128xf32>
    %125 = arith.addf %119, %124 : vector<16x128xf32>
    %126 = vector.extract_strided_slice %2 {offsets = [0, 15], sizes = [16, 1], strides = [1, 1]} : vector<16x16xf32> to vector<16x1xf32>
    %127 = vector.extract_strided_slice %34 {offsets = [15, 0], sizes = [1, 128], strides = [1, 1]} : vector<16x128xf32> to vector<1x128xf32>
    %128 = vector.broadcast %126 : vector<16x1xf32> to vector<16x128xf32>
    %129 = vector.broadcast %127 : vector<1x128xf32> to vector<16x128xf32>
    %130 = arith.mulf %128, %129 : vector<16x128xf32>
    %131 = arith.addf %125, %130 : vector<16x128xf32>
    %cst_10 = arith.constant 0.000000e+00 : f32
    %132 = vector.broadcast %cst_10 : f32 to vector<16x128xf32>
    %133 = arith.maximumf %131, %132 : vector<16x128xf32>
    %134 = vector.broadcast %4 : vector<16x1xf32> to vector<16x128xf32>
    %135 = arith.mulf %134, %133 : vector<16x128xf32>
    %cst_11 = arith.constant dense<0.000000e+00> : vector<128xf32>
    %136 = vector.multi_reduction <add>, %135, %cst_11 [0] : vector<16x128xf32> to vector<128xf32>
    %137 = vector.shape_cast %136 : vector<128xf32> to vector<1x128xf32>
    %138 = vector.broadcast %5 : vector<16x1xf32> to vector<16x128xf32>
    %139 = arith.mulf %138, %133 : vector<16x128xf32>
    %cst_12 = arith.constant dense<0.000000e+00> : vector<128xf32>
    %140 = vector.multi_reduction <add>, %139, %cst_12 [0] : vector<16x128xf32> to vector<128xf32>
    %141 = vector.shape_cast %140 : vector<128xf32> to vector<1x128xf32>
    %142 = tpu.concatenate %137, %141 in 0 : vector<1x128xf32>, vector<1x128xf32> -> vector<2x128xf32>
    %143 = vector.broadcast %6 : vector<2x1xf32> to vector<2x128xf32>
    %144 = arith.addf %142, %143 : vector<2x128xf32>
    %c0_13 = arith.constant 0 : index
    %c0_14 = arith.constant 0 : index
    %145 = vector.load %arg3[%c0_13, %c0_14] : memref<2x128xf32, #tpu.memory_space<vmem>>, vector<2x128xf32>
    tpu.vector_store %arg3[%c0_13, %c0_14], %144 {strides = array<i32>} : memref<2x128xf32, #tpu.memory_space<vmem>>, vector<2x128xf32>,
    return
  }
  func.func @transform_0(%arg0: i32) -> (i32, i32) {
    %c0_i32 = arith.constant 0 : i32
    %c0_i32_0 = arith.constant 0 : i32
    return %c0_i32, %arg0 : i32, i32
  }
  func.func @transform_1(%arg0: i32) -> (i32, i32) {
    %c0_i32 = arith.constant 0 : i32
    %c0_i32_0 = arith.constant 0 : i32
    %c0_i32_1 = arith.constant 0 : i32
    return %c0_i32, %c0_i32_0 : i32, i32
  }
  func.func @transform_2(%arg0: i32) -> (i32, i32) {
    %c0_i32 = arith.constant 0 : i32
    %c0_i32_0 = arith.constant 0 : i32
    return %c0_i32, %arg0 : i32, i32
  }
}

</mosaic_0001>

<llo_original>
// kernel: _qnet_forward_jit.1
$region0: #{_qnet_forward_jit.1}
  #allocation0 [shape = 'u32[]', space=smem, size = 0x4, offset = 0x4, fixed_abs, tag = 'smem constant byte address 0x4 - core index']
  #allocation1 [shape = 'u32[144,128]{1,0:T(1,128)}', space=vmem, size = 0x12000, scoped, tag = 'internal scratch']
  %s0 = inlined_call_operand.vmem [shape: f32[4,128], index: 0, kind: input, shape index: {}]
  %s1 = inlined_call_operand.hbm [shape: f32[48,128], index: 1, kind: input, shape index: {}]
  %s2 = inlined_call_operand.vmem [shape: f32[2,128], index: 2, kind: output, shape index: {}]
  %s3 = sld [smem:[#allocation0]]
  $region22: #{_qnet_forward_jit.1} parent=0
    _
  %s5 = ssub.s32 1, %s3
  %s6 = scalar_select 0, %s5, %s3
  $region1: #{_qnet_forward_jit.1} parent=0
    #allocation2 [shape = 'u8[24576]{0}', space=vmem, size = 0x6000, scoped, tag = 'input window, operand 1, single buffered']
    #allocation3 [shape = 's32[1]{0}', space=sflag, size = 0x4, scoped, tag = 'scoped memory for _qnet_forward_jit.1']
    %7 = vsyncpa [#allocation3], 0
    // Predicated region
    $region2: #{_qnet_forward_jit.1} parent=1 // pred_check
      _
    $region3: #{_qnet_forward_jit.1} parent=1 // pred_check_branch
      %9 = sbr.rel (0) target = $region5
    $region4: #{_qnet_forward_jit.1} parent=1 // pred_region
      _
    $region5: #{_qnet_forward_jit.1} parent=1 // pred_fallthru
      _
    // Predicated region
    $region6: #{_qnet_forward_jit.1} parent=1 // pred_check
      _
    $region7: #{_qnet_forward_jit.1} parent=1 // pred_check_branch
      %11 = sbr.rel (0) target = $region9
    $region8: #{_qnet_forward_jit.1} parent=1 // pred_region
      %s13 = ssub.s32 768, 768
      %14 = vsyncadd [#allocation3], %s13
      %s15 = sshll.u32 [#allocation2], 4
      %s16 = int_to_ptr.vmem [resolvable:$true] %s15
      %21 = dma.hbm_to_vmem [thread:$0]  %s1, 768, %s16, [#allocation3], 128, 128, 8
    $region9: #{_qnet_forward_jit.1} parent=1 // pred_fallthru
      _
    // Predicated region
    $region10: #{_qnet_forward_jit.1} parent=1 // pred_check
      _
    $region11: #{_qnet_forward_jit.1} parent=1 // pred_check_branch
      %23 = sbr.rel (0) target = $region13
    $region12: #{_qnet_forward_jit.1} parent=1 // pred_region
      %24 = dma.done [#allocation3], 768
    $region13: #{_qnet_forward_jit.1} parent=1 // pred_fallthru
      _
    %v25 = vld [vmem:[#allocation2] sm:$0xff]
    %v26 = vld [vmem:[#allocation2 + $0x8] sm:$0xff]
    %v27 = vld [vmem:[#allocation2 + $0x10] sm:$0xff]
    %v28 = vld [vmem:[#allocation2 + $0x18] sm:$0xff]
    %v29 = vld [vmem:[#allocation2 + $0x20] sm:$0xff]
    %v30 = vld [vmem:[#allocation2 + $0x28] sm:$0xff]
    %v31 = vld [vmem:[#allocation2 + $0x20] sm:$0x3]
    %v32 = vld [vmem:[%s0] sm:$0xf]
    %34 = vset.pattern.permute.xlu0 0
    %35 = vperm.xlu0 %34, %v25
    %v36 = vpop.permute.xlu0 %35
    %39 = vset.pattern.permute.xlu0 0
    %40 = vperm.xlu0 %39, %v26
    %v41 = vpop.permute.xlu0 %40
    %v43 = vlaneseq
    %v44 = vshrl.u32 %v43, 7
    %v45 = vsub.s32 0, %v44
    %v46 = vrot.slane %v32, %v45
    %v47 = vmul.f32 %v36, %v46
    %v48 = vmul.f32 %v41, %v46
    %49 = vset.pattern.permute.xlu0 4
    %50 = vperm.xlu0 %49, %v25
    %v51 = vpop.permute.xlu0 %50
    %53 = vset.pattern.permute.xlu0 4
    %54 = vperm.xlu0 %53, %v26
    %v55 = vpop.permute.xlu0 %54
    %v57 = vadd.f32 %v51, %v47
    %v58 = vadd.f32 %v55, %v48
    %59 = vset.pattern.permute.xlu0 1
    %60 = vperm.xlu0 %59, %v25
    %v61 = vpop.permute.xlu0 %60
    %63 = vset.pattern.permute.xlu0 1
    %64 = vperm.xlu0 %63, %v26
    %v65 = vpop.permute.xlu0 %64
    %v67 = vlaneseq
    %v68 = vshrl.u32 %v67, 7
    %v69 = vsub.s32 1, %v68
    %v70 = vrot.slane %v32, %v69
    %v71 = vmul.f32 %v61, %v70
    %v72 = vmul.f32 %v65, %v70
    %v73 = vadd.f32 %v57, %v71
    %v74 = vadd.f32 %v58, %v72
    %75 = vset.pattern.permute.xlu0 2
    %76 = vperm.xlu0 %75, %v25
    %v77 = vpop.permute.xlu0 %76
    %79 = vset.pattern.permute.xlu0 2
    %80 = vperm.xlu0 %79, %v26
    %v81 = vpop.permute.xlu0 %80
    %v83 = vlaneseq
    %v84 = vshrl.u32 %v83, 7
    %v85 = vsub.s32 2, %v84
    %v86 = vrot.slane %v32, %v85
    %v87 = vmul.f32 %v77, %v86
    %v88 = vmul.f32 %v81, %v86
    %v89 = vadd.f32 %v73, %v87
    %v90 = vadd.f32 %v74, %v88
    %91 = vset.pattern.permute.xlu0 3
    %92 = vperm.xlu0 %91, %v25
    %v93 = vpop.permute.xlu0 %92
    %95 = vset.pattern.permute.xlu0 3
    %96 = vperm.xlu0 %95, %v26
    %v97 = vpop.permute.xlu0 %96
    %v99 = vlaneseq
    %v100 = vshrl.u32 %v99, 7
    %v101 = vsub.s32 3, %v100
    %v102 = vrot.slane %v32, %v101
    %v103 = vmul.f32 %v93, %v102
    %v104 = vmul.f32 %v97, %v102
    %v105 = vadd.f32 %v89, %v103
    %v106 = vadd.f32 %v90, %v104
    %v107 = vmax.f32 %v105, 0.0
    %v108 = vmax.f32 %v106, 0.0
    %110 = vset.pattern.permute.xlu0 0
    %111 = vperm.xlu0 %110, %v27
    %v112 = vpop.permute.xlu0 %111
    %115 = vset.pattern.permute.xlu0 0
    %116 = vperm.xlu0 %115, %v28
    %v117 = vpop.permute.xlu0 %116
    %v119 = vlaneseq
    %v120 = vshrl.u32 %v119, 7
    %v121 = vsub.s32 0, %v120
    %v122 = vrot.slane %v107, %v121
    %v123 = vmul.f32 %v112, %v122
    %v124 = vmul.f32 %v117, %v122
    %125 = vset.pattern.permute.xlu0 16
    %126 = vperm.xlu0 %125, %v27
    %v127 = vpop.permute.xlu0 %126
    %129 = vset.pattern.permute.xlu0 16
    %130 = vperm.xlu0 %129, %v28
    %v131 = vpop.permute.xlu0 %130
    %v133 = vadd.f32 %v127, %v123
    %v134 = vadd.f32 %v131, %v124
    %135 = vset.pattern.permute.xlu0 1
    %136 = vperm.xlu0 %135, %v27
    %v137 = vpop.permute.xlu0 %136
    %139 = vset.pattern.permute.xlu0 1
    %140 = vperm.xlu0 %139, %v28
    %v141 = vpop.permute.xlu0 %140
    %v143 = vlaneseq
    %v144 = vshrl.u32 %v143, 7
    %v145 = vsub.s32 1, %v144
    %v146 = vrot.slane %v107, %v145
    %v147 = vmul.f32 %v137, %v146
    %v148 = vmul.f32 %v141, %v146
    %v149 = vadd.f32 %v133, %v147
    %v150 = vadd.f32 %v134, %v148
    %151 = vset.pattern.permute.xlu0 2
    %152 = vperm.xlu0 %151, %v27
    %v153 = vpop.permute.xlu0 %152
    %155 = vset.pattern.permute.xlu0 2
    %156 = vperm.xlu0 %155, %v28
    %v157 = vpop.permute.xlu0 %156
    %v159 = vlaneseq
    %v160 = vshrl.u32 %v159, 7
    %v161 = vsub.s32 2, %v160
    %v162 = vrot.slane %v107, %v161
    %v163 = vmul.f32 %v153, %v162
    %v164 = vmul.f32 %v157, %v162
    %v165 = vadd.f32 %v149, %v163
    %v166 = vadd.f32 %v150, %v164
    %167 = vset.pattern.permute.xlu0 3
    %168 = vperm.xlu0 %167, %v27
    %v169 = vpop.permute.xlu0 %168
    %171 = vset.pattern.permute.xlu0 3
    %172 = vperm.xlu0 %171, %v28
    %v173 = vpop.permute.xlu0 %172
    %v175 = vlaneseq
    %v176 = vshrl.u32 %v175, 7
    %v177 = vsub.s32 3, %v176
    %v178 = vrot.slane %v107, %v177
    %v179 = vmul.f32 %v169, %v178
    %v180 = vmul.f32 %v173, %v178
    %v181 = vadd.f32 %v165, %v179
    %v182 = vadd.f32 %v166, %v180
    %183 = vset.pattern.permute.xlu0 4
    %184 = vperm.xlu0 %183, %v27
    %v185 = vpop.permute.xlu0 %184
    %187 = vset.pattern.permute.xlu0 4
    %188 = vperm.xlu0 %187, %v28
    %v189 = vpop.permute.xlu0 %188
    %v191 = vlaneseq
    %v192 = vshrl.u32 %v191, 7
    %v193 = vsub.s32 4, %v192
    %v194 = vrot.slane %v107, %v193
    %v195 = vmul.f32 %v185, %v194
    %v196 = vmul.f32 %v189, %v194
    %v197 = vadd.f32 %v181, %v195
    %v198 = vadd.f32 %v182, %v196
    %199 = vset.pattern.permute.xlu0 5
    %200 = vperm.xlu0 %199, %v27
    %v201 = vpop.permute.xlu0 %200
    %203 = vset.pattern.permute.xlu0 5
    %204 = vperm.xlu0 %203, %v28
    %v205 = vpop.permute.xlu0 %204
    %v207 = vlaneseq
    %v208 = vshrl.u32 %v207, 7
    %v209 = vsub.s32 5, %v208
    %v210 = vrot.slane %v107, %v209
    %v211 = vmul.f32 %v201, %v210
    %v212 = vmul.f32 %v205, %v210
    %v213 = vadd.f32 %v197, %v211
    %v214 = vadd.f32 %v198, %v212
    %215 = vset.pattern.permute.xlu0 6
    %216 = vperm.xlu0 %215, %v27
    %v217 = vpop.permute.xlu0 %216
    %219 = vset.pattern.permute.xlu0 6
    %220 = vperm.xlu0 %219, %v28
    %v221 = vpop.permute.xlu0 %220
    %v223 = vlaneseq
    %v224 = vshrl.u32 %v223, 7
    %v225 = vsub.s32 6, %v224
    %v226 = vrot.slane %v107, %v225
    %v227 = vmul.f32 %v217, %v226
    %v228 = vmul.f32 %v221, %v226
    %v229 = vadd.f32 %v213, %v227
    %v230 = vadd.f32 %v214, %v228
    %231 = vset.pattern.permute.xlu0 7
    %232 = vperm.xlu0 %231, %v27
    %v233 = vpop.permute.xlu0 %232
    %235 = vset.pattern.permute.xlu0 7
    %236 = vperm.xlu0 %235, %v28
    %v237 = vpop.permute.xlu0 %236
    %v239 = vlaneseq
    %v240 = vshrl.u32 %v239, 7
    %v241 = vsub.s32 7, %v240
    %v242 = vrot.slane %v107, %v241
    %v243 = vmul.f32 %v233, %v242
    %v244 = vmul.f32 %v237, %v242
    %v245 = vadd.f32 %v229, %v243
    %v246 = vadd.f32 %v230, %v244
    %247 = vset.pattern.permute.xlu0 8
    %248 = vperm.xlu0 %247, %v27
    %v249 = vpop.permute.xlu0 %248
    %251 = vset.pattern.permute.xlu0 8
    %252 = vperm.xlu0 %251, %v28
    %v253 = vpop.permute.xlu0 %252
    %v255 = vlaneseq
    %v256 = vshrl.u32 %v255, 7
    %v257 = vsub.s32 0, %v256
    %v258 = vrot.slane %v108, %v257
    %v259 = vmul.f32 %v249, %v258
    %v260 = vmul.f32 %v253, %v258
    %v261 = vadd.f32 %v245, %v259
    %v262 = vadd.f32 %v246, %v260
    %263 = vset.pattern.permute.xlu0 9
    %264 = vperm.xlu0 %263, %v27
    %v265 = vpop.permute.xlu0 %264
    %267 = vset.pattern.permute.xlu0 9
    %268 = vperm.xlu0 %267, %v28
    %v269 = vpop.permute.xlu0 %268
    %v271 = vlaneseq
    %v272 = vshrl.u32 %v271, 7
    %v273 = vsub.s32 1, %v272
    %v274 = vrot.slane %v108, %v273
    %v275 = vmul.f32 %v265, %v274
    %v276 = vmul.f32 %v269, %v274
    %v277 = vadd.f32 %v261, %v275
    %v278 = vadd.f32 %v262, %v276
    %279 = vset.pattern.permute.xlu0 10
    %280 = vperm.xlu0 %279, %v27
    %v281 = vpop.permute.xlu0 %280
    %283 = vset.pattern.permute.xlu0 10
    %284 = vperm.xlu0 %283, %v28
    %v285 = vpop.permute.xlu0 %284
    %v287 = vlaneseq
    %v288 = vshrl.u32 %v287, 7
    %v289 = vsub.s32 2, %v288
    %v290 = vrot.slane %v108, %v289
    %v291 = vmul.f32 %v281, %v290
    %v292 = vmul.f32 %v285, %v290
    %v293 = vadd.f32 %v277, %v291
    %v294 = vadd.f32 %v278, %v292
    %295 = vset.pattern.permute.xlu0 11
    %296 = vperm.xlu0 %295, %v27
    %v297 = vpop.permute.xlu0 %296
    %299 = vset.pattern.permute.xlu0 11
    %300 = vperm.xlu0 %299, %v28
    %v301 = vpop.permute.xlu0 %300
    %v303 = vlaneseq
    %v304 = vshrl.u32 %v303, 7
    %v305 = vsub.s32 3, %v304
    %v306 = vrot.slane %v108, %v305
    %v307 = vmul.f32 %v297, %v306
    %v308 = vmul.f32 %v301, %v306
    %v309 = vadd.f32 %v293, %v307
    %v310 = vadd.f32 %v294, %v308
    %311 = vset.pattern.permute.xlu0 12
    %312 = vperm.xlu0 %311, %v27
    %v313 = vpop.permute.xlu0 %312
    %315 = vset.pattern.permute.xlu0 12
    %316 = vperm.xlu0 %315, %v28
    %v317 = vpop.permute.xlu0 %316
    %v319 = vlaneseq
    %v320 = vshrl.u32 %v319, 7
    %v321 = vsub.s32 4, %v320
    %v322 = vrot.slane %v108, %v321
    %v323 = vmul.f32 %v313, %v322
    %v324 = vmul.f32 %v317, %v322
    %v325 = vadd.f32 %v309, %v323
    %v326 = vadd.f32 %v310, %v324
    %327 = vset.pattern.permute.xlu0 13
    %328 = vperm.xlu0 %327, %v27
    %v329 = vpop.permute.xlu0 %328
    %331 = vset.pattern.permute.xlu0 13
    %332 = vperm.xlu0 %331, %v28
    %v333 = vpop.permute.xlu0 %332
    %v335 = vlaneseq
    %v336 = vshrl.u32 %v335, 7
    %v337 = vsub.s32 5, %v336
    %v338 = vrot.slane %v108, %v337
    %v339 = vmul.f32 %v329, %v338
    %v340 = vmul.f32 %v333, %v338
    %v341 = vadd.f32 %v325, %v339
    %v342 = vadd.f32 %v326, %v340
    %343 = vset.pattern.permute.xlu0 14
    %344 = vperm.xlu0 %343, %v27
    %v345 = vpop.permute.xlu0 %344
    %347 = vset.pattern.permute.xlu0 14
    %348 = vperm.xlu0 %347, %v28
    %v349 = vpop.permute.xlu0 %348
    %v351 = vlaneseq
    %v352 = vshrl.u32 %v351, 7
    %v353 = vsub.s32 6, %v352
    %v354 = vrot.slane %v108, %v353
    %v355 = vmul.f32 %v345, %v354
    %v356 = vmul.f32 %v349, %v354
    %v357 = vadd.f32 %v341, %v355
    %v358 = vadd.f32 %v342, %v356
    %359 = vset.pattern.permute.xlu0 15
    %360 = vperm.xlu0 %359, %v27
    %v361 = vpop.permute.xlu0 %360
    %363 = vset.pattern.permute.xlu0 15
    %364 = vperm.xlu0 %363, %v28
    %v365 = vpop.permute.xlu0 %364
    %v367 = vlaneseq
    %v368 = vshrl.u32 %v367, 7
    %v369 = vsub.s32 7, %v368
    %v370 = vrot.slane %v108, %v369
    %v371 = vmul.f32 %v361, %v370
    %v372 = vmul.f32 %v365, %v370
    %v373 = vadd.f32 %v357, %v371
    %v374 = vadd.f32 %v358, %v372
    %v375 = vmax.f32 %v373, 0.0
    %v376 = vmax.f32 %v374, 0.0
    %378 = vset.pattern.permute.xlu0 0
    %379 = vperm.xlu0 %378, %v29
    %v380 = vpop.permute.xlu0 %379
    %383 = vset.pattern.permute.xlu0 0
    %384 = vperm.xlu0 %383, %v30
    %v385 = vpop.permute.xlu0 %384
    %v387 = vmul.f32 %v380, %v375
    %v388 = vmul.f32 %v385, %v376
    %v389 = vadd.f32 %v387, %v388
    %v390 = vrot.slane %v389, 4
    %v391 = vadd.f32 %v389, %v390
    %v392 = vrot.slane %v391, 2
    %v393 = vadd.f32 %v391, %v392
    %v394 = vrot.slane %v393, 1
    %v395 = vadd.f32 %v393, %v394
    %396 = vset.pattern.permute.xlu0 1
    %397 = vperm.xlu0 %396, %v29
    %v398 = vpop.permute.xlu0 %397
    %400 = vset.pattern.permute.xlu0 1
    %401 = vperm.xlu0 %400, %v30
    %v402 = vpop.permute.xlu0 %401
    %v404 = vmul.f32 %v398, %v375
    %v405 = vmul.f32 %v402, %v376
    %v406 = vadd.f32 %v404, %v405
    %v407 = vrot.slane %v406, 4
    %v408 = vadd.f32 %v406, %v407
    %v409 = vrot.slane %v408, 2
    %v410 = vadd.f32 %v408, %v409
    %v411 = vrot.slane %v410, 1
    %v412 = vadd.f32 %v410, %v411
    %vm413 = vcmask 1040384
    %v414 = vsel %vm413, %v395, %v412
    %416 = vset.pattern.permute.xlu0 2
    %417 = vperm.xlu0 %416, %v31
    %v418 = vpop.permute.xlu0 %417
    %v420 = vadd.f32 %v414, %v418
    %421 = vst [vmem:[%s2] sm:$0x3] %v420
    // Predicated region
    $region14: #{_qnet_forward_jit.1} parent=1 // pred_check
      _
    $region15: #{_qnet_forward_jit.1} parent=1 // pred_check_branch
      %423 = sbr.rel (0) target = $region17
    $region16: #{_qnet_forward_jit.1} parent=1 // pred_region
      _
    $region17: #{_qnet_forward_jit.1} parent=1 // pred_fallthru
      _
    // Predicated region
    $region18: #{_qnet_forward_jit.1} parent=1 // pred_check
      _
    $region19: #{_qnet_forward_jit.1} parent=1 // pred_check_branch
      %425 = sbr.rel (0) target = $region21
    $region20: #{_qnet_forward_jit.1} parent=1 // pred_region
      _
    $region21: #{_qnet_forward_jit.1} parent=1 // pred_fallthru
      _
    %426 = vsyncpa [#allocation3], 1

</llo_original>
